<compile_context>
chip_gen: v6e
topology: v6e:2x2x1
jax: 0.10.0
libtpu: 0.0.40
codegen_flags: <defaults>
</compile_context>

<pallas_src>
import math

import jax
import jax.numpy as jnp
from jax import lax
from jax.experimental import pallas as pl
from jax.experimental.pallas import tpu as pltpu

EPS = 1e-5
NUM_GROUPS = 32


# --------------------------------------------------------------------------
# Pass 1: GroupNorm statistics on the native (N, C, S) layout.
# Accumulates lane-dense (C, 128) partial sums in the resident output block.
# --------------------------------------------------------------------------
def _gn_stats_kernel(x_ref, sum_ref, sumsq_ref):
    si = pl.program_id(1)

    @pl.when(si == 0)
    def _():
        sum_ref[...] = jnp.zeros_like(sum_ref)
        sumsq_ref[...] = jnp.zeros_like(sumsq_ref)

    ts = x_ref.shape[-1]
    s_part = jnp.zeros(sum_ref.shape[1:], jnp.float32)      # (C, 128)
    q_part = jnp.zeros(sum_ref.shape[1:], jnp.float32)
    for j in range(ts // 128):                               # static unroll, VALU only
        blk = x_ref[0, :, j * 128:(j + 1) * 128].astype(jnp.float32)
        s_part = s_part + blk
        q_part = q_part + blk * blk
    sum_ref[0] += s_part
    sumsq_ref[0] += q_part


# --------------------------------------------------------------------------
# Pass 2: fused GroupNorm-apply + K/V projection, once per batch element.
# Channel-major (C, T) tiles: k^T = W_k @ xn^T (plain matmuls, no transposes).
# b_k is dropped (softmax-invariant); b_v is added in the attention epilogue.
# --------------------------------------------------------------------------
def _kv_project_kernel(x_ref, scale_ref, shift_ref, wk_ref, wv_ref, k_ref, v_ref):
    xn = (x_ref[0].astype(jnp.float32) * scale_ref[0]
          + shift_ref[0]).astype(jnp.bfloat16)               # (C, T)
    k_ref[0] = jnp.dot(wk_ref[...], xn,
                       preferred_element_type=jnp.float32).astype(jnp.bfloat16)
    v_ref[0] = jnp.dot(wv_ref[...], xn,
                       preferred_element_type=jnp.float32).astype(jnp.bfloat16)


# --------------------------------------------------------------------------
# Pass 3: flash attention over (batch, q-tile, kv-tile) + out-proj + residual,
# entirely in the channel-major (C, S) layout.
# --------------------------------------------------------------------------
def _flash_attn_kernel(x_ref, k_ref, v_ref, scale_ref, shift_ref,
                       wq_ref, bq_ref, bv_ref, wo_ref, bo_ref,
                       o_ref,
                       m_sc, l_sc, acc_sc, q_sc):
    ki = pl.program_id(2)
    tq = q_sc.shape[0]

    @pl.when(ki == 0)
    def _():
        m_sc[...] = jnp.full_like(m_sc, -jnp.inf)
        l_sc[...] = jnp.zeros_like(l_sc)
        acc_sc[...] = jnp.zeros_like(acc_sc)
        # Project this query tile once; sm_scale and the q bias are pre-folded.
        xn_q = (x_ref[0].astype(jnp.float32) * scale_ref[0]
                + shift_ref[0]).astype(jnp.bfloat16)                      # (C, TQ)
        q_ct = jnp.dot(wq_ref[...], xn_q,
                       preferred_element_type=jnp.float32) + bq_ref[...]  # (C, TQ)
        # (C, TQ) -> (TQ, C) on the MXU via an identity matmul (exact in bf16);
        # avoids any XLU transpose / HBM layout pass for q.
        rows = lax.broadcasted_iota(jnp.int32, (tq, tq), 0)
        cols = lax.broadcasted_iota(jnp.int32, (tq, tq), 1)
        eye = jnp.where(rows == cols, 1.0, 0.0).astype(jnp.bfloat16)
        q_sc[...] = lax.dot_general(
            eye, q_ct.astype(jnp.bfloat16),
            dimension_numbers=(((1,), (1,)), ((), ())),
            preferred_element_type=jnp.float32).astype(jnp.bfloat16)      # (TQ, C)

    # Logits against the precomputed channel-major K tile: plain matmul.
    s = jnp.dot(q_sc[...], k_ref[0], preferred_element_type=jnp.float32)  # (TQ, TK)

    # Online softmax update.
    m_prev = m_sc[...]
    m_new = jnp.maximum(m_prev, jnp.max(s, axis=-1, keepdims=True))
    alpha = jnp.exp(m_prev - m_new)
    p = jnp.exp(s - m_new)
    l_sc[...] = alpha * l_sc[...] + jnp.sum(p, axis=-1, keepdims=True)
    acc_sc[...] = alpha * acc_sc[...] + lax.dot_general(
        p.astype(jnp.bfloat16), v_ref[0],
        dimension_numbers=(((1,), (1,)), ((), ())),
        preferred_element_type=jnp.float32)                               # (TQ, C)
    m_sc[...] = m_new

    @pl.when(ki == pl.num_programs(2) - 1)
    def _():
        # softmax weights sum to 1 -> the V bias contributes exactly +b_v once.
        attn = acc_sc[...] * pl.reciprocal(l_sc[...], approx=True) + bv_ref[...]
        # Output projection directly into channel-major layout: out^T = W_o @ attn^T.
        out_ct = lax.dot_general(
            wo_ref[...], attn.astype(jnp.bfloat16),
            dimension_numbers=(((1,), (1,)), ((), ())),
            preferred_element_type=jnp.float32)                           # (C, TQ)
        o_ref[0] = (out_ct + bo_ref[...]
                    + x_ref[0].astype(jnp.float32)).astype(o_ref.dtype)


def _pick_tile(s, prefer):
    for t in prefer:
        if s >= t and s % t == 0:
            return t
    return s


def _vmem_limit(est_bytes):
    # Explicit scoped-VMEM limit sized to the footprint (defaults: 16 MiB v5e,
    # 32 MiB v6e/v7x); capped at v7x's 64 MiB of physical VMEM.
    return int(min(64 * 2**20, max(2 * est_bytes, 32 * 2**20)))


def vae_attention_block(x_nchw, params, *, tile_q=None, tile_kv=None):
    """x_nchw: (N, C, H, W).  Returns (N, C, H, W)."""
    n, c, h, w = x_nchw.shape
    s = h * w
    assert c % NUM_GROUPS == 0, "GroupNorm(32, C) requires C % 32 == 0"
    assert s % 128 == 0, "H*W must be a multiple of 128 for (8,128) tiling"
    gc = c // NUM_GROUPS
    xb = x_nchw.dtype.itemsize

    gamma, beta, w_in, b_in, w_out, b_out = (
        params["gamma"], params["beta"], params["w_in"], params["b_in"],
        params["w_out"], params["b_out"])

    # Channel-major (N, C, S) view of x -- a free reshape, no HBM transpose.
    x_ncs = x_nchw.reshape(n, c, s)

    # ---- pass 1: GroupNorm statistics ----
    ts = _pick_tile(s, (2048, 1024, 512, 256, 128))
    est1 = 2 * (c * ts * xb) + 4 * (c * 128 * 4)
    colsum_p, colsumsq_p = pl.pallas_call(
        _gn_stats_kernel,
        out_shape=(jax.ShapeDtypeStruct((n, c, 128), jnp.float32),
                   jax.ShapeDtypeStruct((n, c, 128), jnp.float32)),
        grid_spec=pltpu.PrefetchScalarGridSpec(
            num_scalar_prefetch=0,
            grid=(n, s // ts),
            in_specs=[pl.BlockSpec((1, c, ts), lambda b, si: (b, 0, si))],
            out_specs=(pl.BlockSpec((1, c, 128), lambda b, si: (b, 0, 0)),
                       pl.BlockSpec((1, c, 128), lambda b, si: (b, 0, 0)))),
        compiler_params=pltpu.CompilerParams(
            dimension_semantics=("parallel", "arbitrary"),
            vmem_limit_bytes=_vmem_limit(est1)),
    )(x_ncs)

    # Tiny finalize: per-group mean / inv_std -> per-(batch, channel) scale/shift
    # so the hot kernels do a single FMA per element for the norm.
    # NOTE: single-pass E[x^2]-E[x]^2 in f32, clamped >= 0 (slightly less robust
    # to cancellation than the two-pass reference for very large S).
    cnt = float(s * gc)
    colsum = colsum_p.sum(-1)                                    # (N, C)
    colsumsq = colsumsq_p.sum(-1)
    gsum = colsum.reshape(n, NUM_GROUPS, gc).sum(-1)
    gsumsq = colsumsq.reshape(n, NUM_GROUPS, gc).sum(-1)
    gmean = gsum / cnt
    gvar = jnp.maximum(gsumsq / cnt - gmean * gmean, 0.0)
    ginv = lax.rsqrt(gvar + EPS)
    mean_c = jnp.repeat(gmean, gc, axis=-1)                      # (N, C)
    inv_c = jnp.repeat(ginv, gc, axis=-1)
    scale_c = inv_c * gamma[None, :]
    shift_c = beta[None, :] - mean_c * scale_c
    scale_col = scale_c.reshape(n, c, 1).astype(jnp.float32)
    shift_col = shift_c.reshape(n, c, 1).astype(jnp.float32)

    # ---- weight prep (torch (out, in) layout used as-is; no transposes) ----
    sm_scale = 1.0 / math.sqrt(c)                                # 1 head -> d_head == C
    w_q = (w_in[0 * c:1 * c] * sm_scale).astype(jnp.bfloat16)    # sm_scale folded in
    b_q = (b_in[0 * c:1 * c] * sm_scale).reshape(c, 1).astype(jnp.float32)
    w_k = w_in[1 * c:2 * c].astype(jnp.bfloat16)                 # b_k dropped (softmax-invariant)
    w_v = w_in[2 * c:3 * c].astype(jnp.bfloat16)
    b_v = b_in[2 * c:3 * c].reshape(1, c).astype(jnp.float32)    # added once in the epilogue
    w_o = w_out.astype(jnp.bfloat16)
    b_o = b_out.reshape(c, 1).astype(jnp.float32)

    # ---- pass 2: normalized K / V projected once per batch element (bf16) ----
    tp = _pick_tile(s, (1024, 512, 256, 128))
    est2 = 2 * (c * tp * xb + 2 * c * tp * 2) + 2 * (2 * c * c * 2 + 2 * c * 4)
    k_ct, v_ct = pl.pallas_call(
        _kv_project_kernel,
        out_shape=(jax.ShapeDtypeStruct((n, c, s), jnp.bfloat16),
                   jax.ShapeDtypeStruct((n, c, s), jnp.bfloat16)),
        grid_spec=pltpu.PrefetchScalarGridSpec(
            num_scalar_prefetch=0,
            grid=(n, s // tp),
            in_specs=[pl.BlockSpec((1, c, tp), lambda b, i: (b, 0, i)),
                      pl.BlockSpec((1, c, 1), lambda b, i: (b, 0, 0)),
                      pl.BlockSpec((1, c, 1), lambda b, i: (b, 0, 0)),
                      pl.BlockSpec((c, c), lambda b, i: (0, 0)),
                      pl.BlockSpec((c, c), lambda b, i: (0, 0))],
            out_specs=(pl.BlockSpec((1, c, tp), lambda b, i: (b, 0, i)),
                       pl.BlockSpec((1, c, tp), lambda b, i: (b, 0, i)))),
        compiler_params=pltpu.CompilerParams(
            dimension_semantics=("parallel", "parallel"),
            vmem_limit_bytes=_vmem_limit(est2)),
    )(x_ncs, scale_col, shift_col, w_k, w_v)

    # ---- pass 3: flash attention + out-proj + residual ----
    tq = tile_q if tile_q is not None else _pick_tile(s, (512, 256, 128))
    tk = tile_kv if tile_kv is not None else _pick_tile(s, (1024, 512, 256, 128))
    assert s % tq == 0 and s % tk == 0 and tq % 128 == 0 and tk % 128 == 0

    # TODO(synk): mark the grid-invariant weight/bias/scale operands with
    # pipeline_mode=pl.Buffered(1) once single-buffering is confirmed on the
    # installed JAX; frees roughly half of their VMEM (matters on v7x).
    const_spec = lambda shape: pl.BlockSpec(shape, lambda b, qi, ki: (0, 0))
    per_batch = pl.BlockSpec((1, c, 1), lambda b, qi, ki: (b, 0, 0))

    est3 = (2 * (c * tq * xb + 2 * c * tk * 2 + c * tq * xb
                 + 2 * c * c * 2 + 5 * c * 4)
            + tq * c * 6 + 2 * tq * 4
            + 2 * tq * tk * 4 + tq * tq * 2)
    out_ncs = pl.pallas_call(
        _flash_attn_kernel,
        out_shape=jax.ShapeDtypeStruct((n, c, s), x_nchw.dtype),
        grid_spec=pltpu.PrefetchScalarGridSpec(
            num_scalar_prefetch=0,
            grid=(n, s // tq, s // tk),
            in_specs=[
                pl.BlockSpec((1, c, tq), lambda b, qi, ki: (b, 0, qi)),  # x (q src + residual)
                pl.BlockSpec((1, c, tk), lambda b, qi, ki: (b, 0, ki)),  # K^T tile (bf16)
                pl.BlockSpec((1, c, tk), lambda b, qi, ki: (b, 0, ki)),  # V^T tile (bf16)
                per_batch,                                               # scale
                per_batch,                                               # shift
                const_spec((c, c)),                                      # w_q (scaled)
                const_spec((c, 1)),                                      # b_q (scaled, column)
                const_spec((1, c)),                                      # b_v (row)
                const_spec((c, c)),                                      # w_out
                const_spec((c, 1)),                                      # b_out (column)
            ],
            out_specs=pl.BlockSpec((1, c, tq), lambda b, qi, ki: (b, 0, qi)),
            scratch_shapes=[
                pltpu.VMEM((tq, 1), jnp.float32),       # running max
                pltpu.VMEM((tq, 1), jnp.float32),       # running sum
                pltpu.VMEM((tq, c), jnp.float32),       # output accumulator
                pltpu.VMEM((tq, c), jnp.bfloat16),      # cached projected q tile
            ]),
        compiler_params=pltpu.CompilerParams(
            dimension_semantics=("parallel", "parallel", "arbitrary"),
            vmem_limit_bytes=_vmem_limit(est3)),
    )(x_ncs, k_ct, v_ct, scale_col, shift_col, w_q, b_q, b_v, w_o, b_o)

    return out_ncs.reshape(n, c, h, w)


# --------------------------------------------------------------------------
# Pure-JAX reference (matches the PyTorch module, all f32, biases included)
# --------------------------------------------------------------------------
def reference_forward(x_nchw, params):
    n, c, h, w = x_nchw.shape
    gc = c // NUM_GROUPS
    gamma, beta, w_in, b_in, w_out, b_out = (
        params["gamma"], params["beta"], params["w_in"], params["b_in"],
        params["w_out"], params["b_out"])

    xg = x_nchw.reshape(n, NUM_GROUPS, gc, h, w)
    mean = xg.mean(axis=(2, 3, 4), keepdims=True)
    var = xg.var(axis=(2, 3, 4), keepdims=True)
    xn = (xg - mean) / jnp.sqrt(var + EPS)
    xn = xn.reshape(n, c, h, w) * gamma[None, :, None, None] + beta[None, :, None, None]

    xs = jnp.transpose(xn.reshape(n, c, h * w), (0, 2, 1))          # (n, s, c)
    qkv = xs @ w_in.T + b_in
    q, k, v = jnp.split(qkv, 3, axis=-1)
    logits = (q @ jnp.transpose(k, (0, 2, 1))) / math.sqrt(c)
    p = jax.nn.softmax(logits, axis=-1)
    attn = p @ v
    out = attn @ w_out.T + b_out
    out = jnp.transpose(out, (0, 2, 1)).reshape(n, c, h, w)
    return out + x_nchw


def init_params(key, c):
    k1, k2, k3, k4, k5, k6 = jax.random.split(key, 6)
    return {
        "gamma": 1.0 + 0.1 * jax.random.normal(k1, (c,), jnp.float32),
        "beta": 0.1 * jax.random.normal(k2, (c,), jnp.float32),
        "w_in": 0.1 * jax.random.normal(k3, (3 * c, c), jnp.float32),   # nn.Linear(c, 3c)
        "b_in": 0.1 * jax.random.normal(k4, (3 * c,), jnp.float32),
        "w_out": 0.1 * jax.random.normal(k5, (c, c), jnp.float32),      # nn.Linear(c, c)
        "b_out": 0.1 * jax.random.normal(k6, (c,), jnp.float32),
    }


if __name__ == "__main__":
    # GroupNorm(32, C) needs C % 32 == 0 -> C=64; H=W=16 -> S=256 so the 128-wide
    # tiles exercise a real 2x2 (q-tile x kv-tile) flash grid.
    N, C, H, W = 2, 64, 16, 16
    key = jax.random.PRNGKey(0)
    kx, kp = jax.random.split(key)
    x = jax.random.normal(kx, (N, C, H, W), jnp.float32)
    params = init_params(kp, C)

    out = jax.block_until_ready(
        vae_attention_block(x, params, tile_q=128, tile_kv=128))
    ref = jax.block_until_ready(reference_forward(x, params))

    assert out.shape == (N, C, H, W)
    # bf16 MXU operands (f32 accumulation) vs f32 reference -> loosened tolerance.
    max_err = float(jnp.max(jnp.abs(out - ref)))
    assert jnp.allclose(out, ref, atol=3e-2, rtol=3e-2), f"max abs err {max_err}"
    print("KERNEL_OK")
</pallas_src>

<mosaic_0001>
module attributes {stable_mosaic.version = 11 : i64} {
  func.func @_gn_stats_kernel(%arg0: i32, %arg1: i32, %arg2: memref<1x64x256xf32, #tpu.memory_space<vmem>>, %arg3: memref<1x64x128xf32, #tpu.memory_space<vmem>>, %arg4: memref<1x64x128xf32, #tpu.memory_space<vmem>>) attributes {dimension_semantics = [#tpu.dimension_semantics<parallel>, #tpu.dimension_semantics<arbitrary>], iteration_bounds = array<i64: 2, 1>, scalar_prefetch = 0 : i64, scratch_operands = 0 : i64, tpu.core_type = #tpu.core_type<tc>, window_params = [{transform_indices = @transform_0, window_bounds = array<i64: 1, 64, 256>}, {transform_indices = @transform_1, window_bounds = array<i64: 1, 64, 128>}, {transform_indices = @transform_2, window_bounds = array<i64: 1, 64, 128>}]} {
    %c0_i32 = arith.constant 0 : i32
    %0 = arith.cmpi eq, %arg1, %c0_i32 : i32
    %1 = arith.extui %0 : i1 to i32
    %c0_i32_0 = arith.constant 0 : i32
    %2 = arith.cmpi ne, %1, %c0_i32_0 : i32
    scf.if %2 {
      %cst_18 = arith.constant 0.000000e+00 : f32
      %27 = vector.broadcast %cst_18 : f32 to vector<1x64x128xf32>
      %c0_19 = arith.constant 0 : index
      %c0_20 = arith.constant 0 : index
      %c0_21 = arith.constant 0 : index
      %28 = vector.load %arg3[%c0_19, %c0_20, %c0_21] : memref<1x64x128xf32, #tpu.memory_space<vmem>>, vector<1x64x128xf32>
      tpu.vector_store %arg3[%c0_19, %c0_20, %c0_21], %27 {strides = array<i32>} : memref<1x64x128xf32, #tpu.memory_space<vmem>>, vector<1x64x128xf32>,
      %cst_22 = arith.constant 0.000000e+00 : f32
      %29 = vector.broadcast %cst_22 : f32 to vector<1x64x128xf32>
      %c0_23 = arith.constant 0 : index
      %c0_24 = arith.constant 0 : index
      %c0_25 = arith.constant 0 : index
      %30 = vector.load %arg4[%c0_23, %c0_24, %c0_25] : memref<1x64x128xf32, #tpu.memory_space<vmem>>, vector<1x64x128xf32>
      tpu.vector_store %arg4[%c0_23, %c0_24, %c0_25], %29 {strides = array<i32>} : memref<1x64x128xf32, #tpu.memory_space<vmem>>, vector<1x64x128xf32>,
    } else {
    }
    %cst = arith.constant 0.000000e+00 : f32
    %3 = vector.broadcast %cst : f32 to vector<64x128xf32>
    %cst_1 = arith.constant 0.000000e+00 : f32
    %4 = vector.broadcast %cst_1 : f32 to vector<64x128xf32>
    %c0 = arith.constant 0 : index
    %c0_2 = arith.constant 0 : index
    %c0_3 = arith.constant 0 : index
    %5 = vector.load %arg2[%c0, %c0_2, %c0_3] : memref<1x64x256xf32, #tpu.memory_space<vmem>>, vector<1x64x128xf32>
    %6 = vector.shape_cast %5 : vector<1x64x128xf32> to vector<64x128xf32>
    %7 = arith.addf %3, %6 : vector<64x128xf32>
    %8 = arith.mulf %6, %6 : vector<64x128xf32>
    %9 = arith.addf %4, %8 : vector<64x128xf32>
    %c0_4 = arith.constant 0 : index
    %c0_5 = arith.constant 0 : index
    %c128 = arith.constant 128 : index
    %10 = vector.load %arg2[%c0_4, %c0_5, %c128] : memref<1x64x256xf32, #tpu.memory_space<vmem>>, vector<1x64x128xf32>
    %11 = vector.shape_cast %10 : vector<1x64x128xf32> to vector<64x128xf32>
    %12 = arith.addf %7, %11 : vector<64x128xf32>
    %13 = arith.mulf %11, %11 : vector<64x128xf32>
    %14 = arith.addf %9, %13 : vector<64x128xf32>
    %c0_6 = arith.constant 0 : index
    %c0_7 = arith.constant 0 : index
    %c0_8 = arith.constant 0 : index
    %15 = vector.load %arg3[%c0_6, %c0_7, %c0_8] : memref<1x64x128xf32, #tpu.memory_space<vmem>>, vector<1x64x128xf32>
    %16 = vector.shape_cast %15 : vector<1x64x128xf32> to vector<64x128xf32>
    %17 = arith.addf %16, %12 : vector<64x128xf32>
    %c0_9 = arith.constant 0 : index
    %c0_10 = arith.constant 0 : index
    %c0_11 = arith.constant 0 : index
    %18 = vector.load %arg3[%c0_9, %c0_10, %c0_11] : memref<1x64x128xf32, #tpu.memory_space<vmem>>, vector<1x64x128xf32>
    %19 = vector.shape_cast %18 : vector<1x64x128xf32> to vector<64x128xf32>
    %20 = vector.shape_cast %17 : vector<64x128xf32> to vector<1x64x128xf32>
    tpu.vector_store %arg3[%c0_9, %c0_10, %c0_11], %20 {strides = array<i32>} : memref<1x64x128xf32, #tpu.memory_space<vmem>>, vector<1x64x128xf32>,
    %c0_12 = arith.constant 0 : index
    %c0_13 = arith.constant 0 : index
    %c0_14 = arith.constant 0 : index
    %21 = vector.load %arg4[%c0_12, %c0_13, %c0_14] : memref<1x64x128xf32, #tpu.memory_space<vmem>>, vector<1x64x128xf32>
    %22 = vector.shape_cast %21 : vector<1x64x128xf32> to vector<64x128xf32>
    %23 = arith.addf %22, %14 : vector<64x128xf32>
    %c0_15 = arith.constant 0 : index
    %c0_16 = arith.constant 0 : index
    %c0_17 = arith.constant 0 : index
    %24 = vector.load %arg4[%c0_15, %c0_16, %c0_17] : memref<1x64x128xf32, #tpu.memory_space<vmem>>, vector<1x64x128xf32>
    %25 = vector.shape_cast %24 : vector<1x64x128xf32> to vector<64x128xf32>
    %26 = vector.shape_cast %23 : vector<64x128xf32> to vector<1x64x128xf32>
    tpu.vector_store %arg4[%c0_15, %c0_16, %c0_17], %26 {strides = array<i32>} : memref<1x64x128xf32, #tpu.memory_space<vmem>>, vector<1x64x128xf32>,
    return
  }
  func.func @transform_0(%arg0: i32, %arg1: i32) -> (i32, i32, i32) {
    %c0_i32 = arith.constant 0 : i32
    %c0_i32_0 = arith.constant 0 : i32
    return %arg0, %c0_i32, %arg1 : i32, i32, i32
  }
  func.func @transform_1(%arg0: i32, %arg1: i32) -> (i32, i32, i32) {
    %c0_i32 = arith.constant 0 : i32
    %c0_i32_0 = arith.constant 0 : i32
    %c0_i32_1 = arith.constant 0 : i32
    return %arg0, %c0_i32, %c0_i32_0 : i32, i32, i32
  }
  func.func @transform_2(%arg0: i32, %arg1: i32) -> (i32, i32, i32) {
    %c0_i32 = arith.constant 0 : i32
    %c0_i32_0 = arith.constant 0 : i32
    %c0_i32_1 = arith.constant 0 : i32
    return %arg0, %c0_i32, %c0_i32_0 : i32, i32, i32
  }
}

</mosaic_0001>

<llo_original>
// kernel: tpu_custom_call.1
$region0: #{tpu_custom_call.1}
  #allocation0 [shape = 'u32[]', space=smem, size = 0x4, offset = 0x4, fixed_abs, tag = 'smem constant byte address 0x4 - core index']
  #allocation1 [shape = 'u32[144,128]{1,0:T(1,128)}', space=vmem, size = 0x12000, scoped, tag = 'internal scratch']
  %s0 = inlined_call_operand.hbm [shape: f32[2,64,256], index: 0, kind: input, shape index: {}]
  %s1 = inlined_call_operand.hbm [shape: f32[2,64,128], index: 1, kind: output, shape index: {0}]
  %s2 = inlined_call_operand.hbm [shape: f32[2,64,128], index: 2, kind: output, shape index: {1}]
  %3 = xla_tuple %s1, %s2
  %s4 = sld [smem:[#allocation0]]
  $region53: #{tpu_custom_call.1} parent=0
    _
  %s6 = ssub.s32 1, %s4
  %s7 = scalar_select 0, %s6, %s4
  $region1: #{tpu_custom_call.1} parent=0
    #allocation2 [shape = 'u8[131072]{0}', space=vmem, size = 0x20000, scoped, tag = 'input window, operand 0']
    #allocation3 [shape = 's32[2]{0}', space=sflag, size = 0x8, scoped, tag = 'scoped memory for tpu_custom_call.1']
    #allocation4 [shape = 's32[2]{0}', space=sflag, size = 0x8, scoped, tag = 'scoped memory for tpu_custom_call.1']
    #allocation5 [shape = 'u8[65536]{0}', space=vmem, size = 0x10000, scoped, tag = 'output window, operand 0']
    #allocation6 [shape = 'u8[65536]{0}', space=vmem, size = 0x10000, scoped, tag = 'output window, operand 1']
    #allocation7 [shape = 's32[2]{0}', space=sflag, size = 0x8, scoped, tag = 'scoped memory for tpu_custom_call.1']
    %8 = vsyncpa [#allocation3], 0
    %s9 = scalar_lea.sflag [#allocation3], 1
    %10 = vsyncpa %s9, 0
    %11 = vsyncpa [#allocation4], 0
    %s12 = scalar_lea.sflag [#allocation4], 1
    %13 = vsyncpa %s12, 0
    %14 = vsyncpa [#allocation7], 0
    %s15 = scalar_lea.sflag [#allocation7], 1
    %16 = vsyncpa %s15, 0
    loop: start=0, step=1, limit=4
    $region2: #{tpu_custom_call.1} parent=1 // loop_pre_header
      _
    $region3: #{tpu_custom_call.1} parent=1 // loop_header
      %s18 = sphi 0, %s22
      %p19 = scmp.ge.s32.totalorder %s18, 4
      %s25 = sphi 0, %s37
      %s26 = sphi 0, %s33
      %s27 = sphi 0, %s25
      %s28 = sphi 0, %s26
      %s29 = sphi 0, %s27
      %s30 = sphi 0, %s28
      %s42 = sphi 0, %s44
      %s45 = sphi 0, %s42
      %s46 = sphi 0, %s45
      %s62 = sphi 0, %s46
      %s68 = sphi 0, %s70
      %s71 = sphi 0, %s68
      %s72 = sphi 0, %s71
      %s88 = sphi 0, %s72
      %s94 = sphi 0, %s96
      %s97 = sphi 0, %s94
      %s98 = sphi 0, %s97
      %s114 = sphi 0, %s98
    $region4: #{tpu_custom_call.1} parent=1 // loop_header_branch
      %21 = sbr.rel (%p19) target = $region8
    $region5: #{tpu_custom_call.1} parent=1 // loop_body
      %s23 = ssub.s32 %s18, 1
      %s24 = ssub.s32 %s18, 2
      %s31 = sadd.s32 1, %s26
      %p32 = scmp.ge.s32.totalorder %s31, 1
      %s33 = scalar_select %p32, 0, %s31
      %s34 = sadd.s32 1, %s25
      %s35 = scalar_select %p32, %s34, %s25
      %p36 = scmp.ge.s32.totalorder %s35, 2
      %s37 = scalar_select %p36, 0, %s35
      %s38 = ssub.s32 %s25, %s37
      %s39 = ssub.s32 %s26, %s33
      %s40 = sor.u32 %s38, %s39
      %p41 = scmp.eq.s32.totalorder %s40, 0
      %s43 = sadd.s32 %s42, 1
      %s44 = scalar_select %p41, %s42, %s43
      %p47 = pneg %p41
      %p48 = scmp.eq.s32.totalorder %s18, 1
      %p49 = por %p47, %p48
      %p50 = scmp.ne.s32.totalorder %s42, %s45
      %p51 = scmp.eq.s32.totalorder %s18, 0
      %p52 = por %p50, %p51
      %p53 = scmp.ne.s32.totalorder %s42, %s45
      %p54 = scmp.eq.s32.totalorder %s23, 1
      %p55 = por %p53, %p54
      %p56 = scmp.ne.s32.totalorder %s45, %s46
      %p57 = scmp.eq.s32.totalorder %s23, 0
      %p58 = por %p56, %p57
      %p59 = scmp.ne.s32.totalorder %s45, %s46
      %p60 = scmp.eq.s32.totalorder %s24, 1
      %p61 = por %p59, %p60
      %p63 = scmp.ne.s32.totalorder %s46, %s62
      %p64 = scmp.eq.s32.totalorder %s24, 0
      %p65 = por %p63, %p64
      %s66 = ssub.s32 %s25, %s37
      %p67 = scmp.eq.s32.totalorder %s66, 0
      %s69 = sadd.s32 %s68, 1
      %s70 = scalar_select %p67, %s68, %s69
      %p73 = pneg %p67
      %p74 = scmp.eq.s32.totalorder %s18, 1
      %p75 = por %p73, %p74
      %p76 = scmp.ne.s32.totalorder %s68, %s71
      %p77 = scmp.eq.s32.totalorder %s18, 0
      %p78 = por %p76, %p77
      %p79 = scmp.ne.s32.totalorder %s68, %s71
      %p80 = scmp.eq.s32.totalorder %s23, 1
      %p81 = por %p79, %p80
      %p82 = scmp.ne.s32.totalorder %s71, %s72
      %p83 = scmp.eq.s32.totalorder %s23, 0
      %p84 = por %p82, %p83
      %p85 = scmp.ne.s32.totalorder %s71, %s72
      %p86 = scmp.eq.s32.totalorder %s24, 1
      %p87 = por %p85, %p86
      %p89 = scmp.ne.s32.totalorder %s72, %s88
      %p90 = scmp.eq.s32.totalorder %s24, 0
      %p91 = por %p89, %p90
      %s92 = ssub.s32 %s25, %s37
      %p93 = scmp.eq.s32.totalorder %s92, 0
      %s95 = sadd.s32 %s94, 1
      %s96 = scalar_select %p93, %s94, %s95
      %p99 = pneg %p93
      %p100 = scmp.eq.s32.totalorder %s18, 1
      %p101 = por %p99, %p100
      %p102 = scmp.ne.s32.totalorder %s94, %s97
      %p103 = scmp.eq.s32.totalorder %s18, 0
      %p104 = por %p102, %p103
      %p105 = scmp.ne.s32.totalorder %s94, %s97
      %p106 = scmp.eq.s32.totalorder %s23, 1
      %p107 = por %p105, %p106
      %p108 = scmp.ne.s32.totalorder %s97, %s98
      %p109 = scmp.eq.s32.totalorder %s23, 0
      %p110 = por %p108, %p109
      %p111 = scmp.ne.s32.totalorder %s97, %s98
      %p112 = scmp.eq.s32.totalorder %s24, 1
      %p113 = por %p111, %p112
      %p115 = scmp.ne.s32.totalorder %s98, %s114
      %p116 = scmp.eq.s32.totalorder %s24, 0
      %p117 = por %p115, %p116
      %p118 = scmp.le.s32.totalorder 1, %s18
      %p119 = scmp.lt.s32.totalorder %s18, 3
      %p120 = pnand %p118, %p119
      %p121 = pneg %p120
      // Predicated region
      $region9: #{tpu_custom_call.1} parent=5 // pred_check
        _
      $region10: #{tpu_custom_call.1} parent=5 // pred_check_branch
        %123 = sbr.rel (%p120) target = $region12
      $region11: #{tpu_custom_call.1} parent=5 // pred_region
        %s124 = ssub.s32 %s18, 1
      $region12: #{tpu_custom_call.1} parent=5 // pred_fallthru
        _
      %p125 = scmp.lt.s32.totalorder %s18, 2
      // Predicated region
      $region13: #{tpu_custom_call.1} parent=5 // pred_check
        %p126 = pneg %p125
      $region14: #{tpu_custom_call.1} parent=5 // pred_check_branch
        %128 = sbr.rel (%p126) target = $region16
      $region15: #{tpu_custom_call.1} parent=5 // pred_region
        // Predicated region
        $region17: #{tpu_custom_call.1} parent=15 // pred_check
          %p129 = pneg %p52
        $region18: #{tpu_custom_call.1} parent=15 // pred_check_branch
          %131 = sbr.rel (%p129) target = $region20
        $region19: #{tpu_custom_call.1} parent=15 // pred_region
          %s132 = sand.u32 %s42, 1
          %s133 = scalar_lea.sflag [#allocation3], %s132
          %s134 = sand.u32 %s42, 1
          %s135 = smul.addr %s134, 128
          %s136 = scalar_lea.vmem [#allocation2], %s135
          %s137 = smul.u32 2, %s26
          %s139 = ssub.s32 2048, 2048
          %140 = vsyncadd %s133, %s139
          %s141 = smul.addr %s25, 16
          %s142 = sadd.s32 %s137, %s141
          %s143 = smul.addr %s142, 128
          %s144 = scalar_lea.hbm %s0, %s143
          %s145 = sshll.u32 %s136, 4
          %s146 = int_to_ptr.vmem [resolvable:$true] %s145
          %151 = dma.hbm_to_vmem [thread:$0]  %s144, 2048, %s146, %s133, 256, 256, 16
        $region20: #{tpu_custom_call.1} parent=15 // pred_fallthru
          _
      $region16: #{tpu_custom_call.1} parent=5 // pred_fallthru
        _
      %p152 = scmp.le.s32.totalorder 1, %s18
      %p153 = scmp.lt.s32.totalorder %s18, 3
      %p154 = pnand %p152, %p153
      %p155 = pneg %p154
      // Predicated region
      $region21: #{tpu_custom_call.1} parent=5 // pred_check
        _
      $region22: #{tpu_custom_call.1} parent=5 // pred_check_branch
        %157 = sbr.rel (%p154) target = $region24
      $region23: #{tpu_custom_call.1} parent=5 // pred_region
        %s158 = ssub.s32 %s18, 1
        %s159 = sand.u32 %s45, 1
        %s160 = scalar_lea.sflag [#allocation3], %s159
        %s161 = sand.u32 %s45, 1
        %s162 = smul.addr %s161, 128
        %s163 = scalar_lea.vmem [#allocation2], %s162
        // Predicated region
        $region25: #{tpu_custom_call.1} parent=23 // pred_check
          %p164 = pneg %p58
        $region26: #{tpu_custom_call.1} parent=23 // pred_check_branch
          %166 = sbr.rel (%p164) target = $region28
        $region27: #{tpu_custom_call.1} parent=23 // pred_region
          %167 = dma.done %s160, 2048
        $region28: #{tpu_custom_call.1} parent=23 // pred_fallthru
          _
        %s168 = sand.u32 %s45, 1
        %s169 = scalar_lea.sflag [#allocation3], %s168
        %s170 = sand.u32 %s45, 1
        %s171 = smul.addr %s170, 128
        %s172 = scalar_lea.vmem [#allocation2], %s171
        %p173 = pneg %p58
        %p174 = pneg %p55
        %p175 = pneg %p84
        %p176 = pneg %p81
        %s177 = sand.u32 %s71, 1
        %s178 = scalar_lea.sflag [#allocation4], %s177
        %s179 = sand.u32 %s71, 1
        %s180 = smul.addr %s179, 64
        %s181 = scalar_lea.vmem [#allocation5], %s180
        %p182 = pneg %p110
        %p183 = pneg %p107
        %s184 = sand.u32 %s97, 1
        %s185 = scalar_lea.sflag [#allocation7], %s184
        %s186 = sand.u32 %s97, 1
        %s187 = smul.addr %s186, 64
        %s188 = scalar_lea.vmem [#allocation6], %s187
        %s189 = smul.u32 2, %s28
        %p190 = scmp.eq.s32.totalorder %s28, 0
        // Predicated region
        $region29: #{tpu_custom_call.1} parent=23 // pred_check
          %p191 = pneg %p190
        $region30: #{tpu_custom_call.1} parent=23 // pred_check_branch
          %193 = sbr.rel (%p191) target = $region32
        $region31: #{tpu_custom_call.1} parent=23 // pred_region
          %194 = vst [vmem:[%s181] sm:$0xff] 0.0
          %195 = vst [vmem:[%s181 + $0x8] sm:$0xff] 0.0
          %196 = vst [vmem:[%s181 + $0x10] sm:$0xff] 0.0
          %197 = vst [vmem:[%s181 + $0x18] sm:$0xff] 0.0
          %198 = vst [vmem:[%s181 + $0x20] sm:$0xff] 0.0
          %199 = vst [vmem:[%s181 + $0x28] sm:$0xff] 0.0
          %200 = vst [vmem:[%s181 + $0x30] sm:$0xff] 0.0
          %201 = vst [vmem:[%s181 + $0x38] sm:$0xff] 0.0
          %202 = vst [vmem:[%s188] sm:$0xff] 0.0
          %203 = vst [vmem:[%s188 + $0x8] sm:$0xff] 0.0
          %204 = vst [vmem:[%s188 + $0x10] sm:$0xff] 0.0
          %205 = vst [vmem:[%s188 + $0x18] sm:$0xff] 0.0
          %206 = vst [vmem:[%s188 + $0x20] sm:$0xff] 0.0
          %207 = vst [vmem:[%s188 + $0x28] sm:$0xff] 0.0
          %208 = vst [vmem:[%s188 + $0x30] sm:$0xff] 0.0
          %209 = vst [vmem:[%s188 + $0x38] sm:$0xff] 0.0
        $region32: #{tpu_custom_call.1} parent=23 // pred_fallthru
          _
        %v210 = vld [vmem:[%s163] sm:$0xff]
        %v211 = vld [vmem:[%s163 + $0x10] sm:$0xff]
        %v212 = vld [vmem:[%s163 + $0x20] sm:$0xff]
        %v213 = vld [vmem:[%s163 + $0x30] sm:$0xff]
        %v214 = vld [vmem:[%s163 + $0x40] sm:$0xff]
        %v215 = vld [vmem:[%s163 + $0x50] sm:$0xff]
        %v216 = vld [vmem:[%s163 + $0x60] sm:$0xff]
        %v217 = vld [vmem:[%s163 + $0x70] sm:$0xff]
        %v218 = vadd.f32 %v210, 0.0
        %v219 = vadd.f32 %v211, 0.0
        %v220 = vadd.f32 %v212, 0.0
        %v221 = vadd.f32 %v213, 0.0
        %v222 = vadd.f32 %v214, 0.0
        %v223 = vadd.f32 %v215, 0.0
        %v224 = vadd.f32 %v216, 0.0
        %v225 = vadd.f32 %v217, 0.0
        %v226 = vmul.f32 %v210, %v210
        %v227 = vmul.f32 %v211, %v211
        %v228 = vmul.f32 %v212, %v212
        %v229 = vmul.f32 %v213, %v213
        %v230 = vmul.f32 %v214, %v214
        %v231 = vmul.f32 %v215, %v215
        %v232 = vmul.f32 %v216, %v216
        %v233 = vmul.f32 %v217, %v217
        %v234 = vadd.f32 %v226, 0.0
        %v235 = vadd.f32 %v227, 0.0
        %v236 = vadd.f32 %v228, 0.0
        %v237 = vadd.f32 %v229, 0.0
        %v238 = vadd.f32 %v230, 0.0
        %v239 = vadd.f32 %v231, 0.0
        %v240 = vadd.f32 %v232, 0.0
        %v241 = vadd.f32 %v233, 0.0
        %v242 = vld [vmem:[%s163 + $0x8] sm:$0xff]
        %v243 = vld [vmem:[%s163 + $0x18] sm:$0xff]
        %v244 = vld [vmem:[%s163 + $0x28] sm:$0xff]
        %v245 = vld [vmem:[%s163 + $0x38] sm:$0xff]
        %v246 = vld [vmem:[%s163 + $0x48] sm:$0xff]
        %v247 = vld [vmem:[%s163 + $0x58] sm:$0xff]
        %v248 = vld [vmem:[%s163 + $0x68] sm:$0xff]
        %v249 = vld [vmem:[%s163 + $0x78] sm:$0xff]
        %v250 = vadd.f32 %v218, %v242
        %v251 = vadd.f32 %v219, %v243
        %v252 = vadd.f32 %v220, %v244
        %v253 = vadd.f32 %v221, %v245
        %v254 = vadd.f32 %v222, %v246
        %v255 = vadd.f32 %v223, %v247
        %v256 = vadd.f32 %v224, %v248
        %v257 = vadd.f32 %v225, %v249
        %v258 = vmul.f32 %v242, %v242
        %v259 = vmul.f32 %v243, %v243
        %v260 = vmul.f32 %v244, %v244
        %v261 = vmul.f32 %v245, %v245
        %v262 = vmul.f32 %v246, %v246
        %v263 = vmul.f32 %v247, %v247
        %v264 = vmul.f32 %v248, %v248
        %v265 = vmul.f32 %v249, %v249
        %v266 = vadd.f32 %v234, %v258
        %v267 = vadd.f32 %v235, %v259
        %v268 = vadd.f32 %v236, %v260
        %v269 = vadd.f32 %v237, %v261
        %v270 = vadd.f32 %v238, %v262
        %v271 = vadd.f32 %v239, %v263
        %v272 = vadd.f32 %v240, %v264
        %v273 = vadd.f32 %v241, %v265
        %v274 = vld [vmem:[%s181] sm:$0xff]
        %v275 = vld [vmem:[%s181 + $0x8] sm:$0xff]
        %v276 = vld [vmem:[%s181 + $0x10] sm:$0xff]
        %v277 = vld [vmem:[%s181 + $0x18] sm:$0xff]
        %v278 = vld [vmem:[%s181 + $0x20] sm:$0xff]
        %v279 = vld [vmem:[%s181 + $0x28] sm:$0xff]
        %v280 = vld [vmem:[%s181 + $0x30] sm:$0xff]
        %v281 = vld [vmem:[%s181 + $0x38] sm:$0xff]
        %v282 = vadd.f32 %v274, %v250
        %v283 = vadd.f32 %v275, %v251
        %v284 = vadd.f32 %v276, %v252
        %v285 = vadd.f32 %v277, %v253
        %v286 = vadd.f32 %v278, %v254
        %v287 = vadd.f32 %v279, %v255
        %v288 = vadd.f32 %v280, %v256
        %v289 = vadd.f32 %v281, %v257
        %290 = vst [vmem:[%s181] sm:$0xff] %v282
        %291 = vst [vmem:[%s181 + $0x8] sm:$0xff] %v283
        %292 = vst [vmem:[%s181 + $0x10] sm:$0xff] %v284
        %293 = vst [vmem:[%s181 + $0x18] sm:$0xff] %v285
        %294 = vst [vmem:[%s181 + $0x20] sm:$0xff] %v286
        %295 = vst [vmem:[%s181 + $0x28] sm:$0xff] %v287
        %296 = vst [vmem:[%s181 + $0x30] sm:$0xff] %v288
        %297 = vst [vmem:[%s181 + $0x38] sm:$0xff] %v289
        %v298 = vld [vmem:[%s188] sm:$0xff]
        %v299 = vld [vmem:[%s188 + $0x8] sm:$0xff]
        %v300 = vld [vmem:[%s188 + $0x10] sm:$0xff]
        %v301 = vld [vmem:[%s188 + $0x18] sm:$0xff]
        %v302 = vld [vmem:[%s188 + $0x20] sm:$0xff]
        %v303 = vld [vmem:[%s188 + $0x28] sm:$0xff]
        %v304 = vld [vmem:[%s188 + $0x30] sm:$0xff]
        %v305 = vld [vmem:[%s188 + $0x38] sm:$0xff]
        %v306 = vadd.f32 %v298, %v266
        %v307 = vadd.f32 %v299, %v267
        %v308 = vadd.f32 %v300, %v268
        %v309 = vadd.f32 %v301, %v269
        %v310 = vadd.f32 %v302, %v270
        %v311 = vadd.f32 %v303, %v271
        %v312 = vadd.f32 %v304, %v272
        %v313 = vadd.f32 %v305, %v273
        %314 = vst [vmem:[%s188] sm:$0xff] %v306
        %315 = vst [vmem:[%s188 + $0x8] sm:$0xff] %v307
        %316 = vst [vmem:[%s188 + $0x10] sm:$0xff] %v308
        %317 = vst [vmem:[%s188 + $0x18] sm:$0xff] %v309
        %318 = vst [vmem:[%s188 + $0x20] sm:$0xff] %v310
        %319 = vst [vmem:[%s188 + $0x28] sm:$0xff] %v311
        %320 = vst [vmem:[%s188 + $0x30] sm:$0xff] %v312
        %321 = vst [vmem:[%s188 + $0x38] sm:$0xff] %v313
        %s322 = sand.u32 %s71, 1
        %s323 = scalar_lea.sflag [#allocation4], %s322
        %s324 = sand.u32 %s71, 1
        %s325 = smul.addr %s324, 64
        %s326 = scalar_lea.vmem [#allocation5], %s325
        %s327 = sand.u32 %s97, 1
        %s328 = scalar_lea.sflag [#allocation7], %s327
        %s329 = sand.u32 %s97, 1
        %s330 = smul.addr %s329, 64
        %s331 = scalar_lea.vmem [#allocation6], %s330
        // Predicated region
        $region33: #{tpu_custom_call.1} parent=23 // pred_check
          %p332 = pneg %p81
        $region34: #{tpu_custom_call.1} parent=23 // pred_check_branch
          %334 = sbr.rel (%p332) target = $region36
        $region35: #{tpu_custom_call.1} parent=23 // pred_region
          %s336 = ssub.s32 1024, 1024
          %337 = vsyncadd %s323, %s336
          %s338 = smul.addr %s27, 8
          %s339 = smul.addr %s338, 128
          %s340 = scalar_lea.hbm %s1, %s339
          %s341 = sshll.u32 %s326, 4
          %s342 = int_to_ptr.vmem [resolvable:$true] %s341
          %347 = dma.vmem_to_hbm [thread:$0]  %s342, 1024, %s340, %s323, 128, 128, 8
        $region36: #{tpu_custom_call.1} parent=23 // pred_fallthru
          _
        // Predicated region
        $region37: #{tpu_custom_call.1} parent=23 // pred_check
          %p348 = pneg %p107
        $region38: #{tpu_custom_call.1} parent=23 // pred_check_branch
          %350 = sbr.rel (%p348) target = $region40
        $region39: #{tpu_custom_call.1} parent=23 // pred_region
          %s352 = ssub.s32 1024, 1024
          %353 = vsyncadd %s328, %s352
          %s354 = smul.addr %s27, 8
          %s355 = smul.addr %s354, 128
          %s356 = scalar_lea.hbm %s2, %s355
          %s357 = sshll.u32 %s331, 4
          %s358 = int_to_ptr.vmem [resolvable:$true] %s357
          %363 = dma.vmem_to_hbm [thread:$0]  %s358, 1024, %s356, %s328, 128, 128, 8
        $region40: #{tpu_custom_call.1} parent=23 // pred_fallthru
          _
      $region24: #{tpu_custom_call.1} parent=5 // pred_fallthru
        _
      %p364 = scmp.le.s32.totalorder 2, %s18
      // Predicated region
      $region41: #{tpu_custom_call.1} parent=5 // pred_check
        %p365 = pneg %p364
      $region42: #{tpu_custom_call.1} parent=5 // pred_check_branch
        %367 = sbr.rel (%p365) target = $region44
      $region43: #{tpu_custom_call.1} parent=5 // pred_region
        %s368 = ssub.s32 %s18, 2
        // Predicated region
        $region45: #{tpu_custom_call.1} parent=43 // pred_check
          %p369 = pneg %p87
        $region46: #{tpu_custom_call.1} parent=43 // pred_check_branch
          %371 = sbr.rel (%p369) target = $region48
        $region47: #{tpu_custom_call.1} parent=43 // pred_region
          %s372 = sand.u32 %s72, 1
          %s373 = scalar_lea.sflag [#allocation4], %s372
          %s374 = sand.u32 %s72, 1
          %s375 = smul.addr %s374, 64
          %s376 = scalar_lea.vmem [#allocation5], %s375
          %377 = dma.done %s373, 1024
        $region48: #{tpu_custom_call.1} parent=43 // pred_fallthru
          _
        // Predicated region
        $region49: #{tpu_custom_call.1} parent=43 // pred_check
          %p378 = pneg %p113
        $region50: #{tpu_custom_call.1} parent=43 // pred_check_branch
          %380 = sbr.rel (%p378) target = $region52
        $region51: #{tpu_custom_call.1} parent=43 // pred_region
          %s381 = sand.u32 %s98, 1
          %s382 = scalar_lea.sflag [#allocation7], %s381
          %s383 = sand.u32 %s98, 1
          %s384 = smul.addr %s383, 64
          %s385 = scalar_lea.vmem [#allocation6], %s384
          %386 = dma.done %s382, 1024
        $region52: #{tpu_custom_call.1} parent=43 // pred_fallthru
          _
      $region44: #{tpu_custom_call.1} parent=5 // pred_fallthru
        _
    $region6: #{tpu_custom_call.1} parent=1 // loop_footer
      %s22 = sadd.s32 1, %s18
    $region7: #{tpu_custom_call.1} parent=1 // loop_footer_branch
      %17 = sbr.rel target = $region3
    $region8: #{tpu_custom_call.1} parent=1 // loop_exit
      _
    %387 = vsyncpa [#allocation3], 1
    %s388 = scalar_lea.sflag [#allocation3], 1
    %389 = vsyncpa %s388, 1
    %390 = vsyncpa [#allocation4], 1
    %s391 = scalar_lea.sflag [#allocation4], 1
    %392 = vsyncpa %s391, 1
    %393 = vsyncpa [#allocation7], 1
    %s394 = scalar_lea.sflag [#allocation7], 1
    %395 = vsyncpa %s394, 1

</llo_original>
